<compile_context>
chip_gen: v7x
topology: tpu7x:2x2x1
jax: 0.10.0
libtpu: 0.0.40
codegen_flags: <defaults>
</compile_context>

<pallas_src>
import functools

import jax
import jax.numpy as jnp
import numpy as np
from jax import lax
from jax.experimental import pallas as pl
from jax.experimental.pallas import tpu as pltpu

_LANE = 128
_SUBLANE = 8
_NEG_BIG = -1e30  # "minus infinity" for padded logit columns


def _round_up(n, m):
    return ((n + m - 1) // m) * m


def _hash_bits_u32(shape, seed_u32, salt):
    """Counter-based per-element pseudo-random uint32 bits.

    Pure vector integer ops (iota / mul / xor / shift) -> lowers on Mosaic TPU
    and under Pallas interpret mode (unlike pltpu.prng_*)."""
    r = lax.broadcasted_iota(jnp.int32, shape, 0).astype(jnp.uint32)
    c = lax.broadcasted_iota(jnp.int32, shape, 1).astype(jnp.uint32)
    x = (seed_u32 + jnp.uint32(salt)
         + r * jnp.uint32(0x9E3779B9) + c * jnp.uint32(0x85EBCA6B))
    x = (x ^ (x >> jnp.uint32(16))) * jnp.uint32(0x7FEB352D)
    x = (x ^ (x >> jnp.uint32(15))) * jnp.uint32(0x846CA68B)
    return x ^ (x >> jnp.uint32(16))


def _dropout(h, seed_u32, salt, p):
    """Inverted dropout matching torch semantics: zero w.p. p, scale by 1/(1-p).

    Integer threshold compare on the top 24 bits (no int->float convert),
    then a single f32 select; elementwise math stays f32."""
    bits = _hash_bits_u32(h.shape, seed_u32, salt)
    thresh = jnp.int32(int(round(p * (1 << 24))))
    keep = (bits >> jnp.uint32(8)).astype(jnp.int32) >= thresh  # P(keep)=1-p
    return jnp.where(keep, h * jnp.float32(1.0 / (1.0 - p)), jnp.float32(0.0))


def _ff_body(x_ref, w1_ref, b1_ref, w2_ref, b2_ref, w3_ref, b3_ref, o_ref,
             *, drop_prob, training, seed_ref, use_bf16):
    x = x_ref[...]
    mxu_dt = jnp.bfloat16 if use_bf16 else jnp.float32

    if training and drop_prob > 0.0:
        # Per-tile seed so different batch tiles never repeat the same mask.
        step = pl.program_id(0)
        seed_u32 = (seed_ref[0].astype(jnp.uint32)
                    + step.astype(jnp.uint32) * jnp.uint32(0x9E3779B1))
    else:
        seed_u32 = None

    # fc1 -> relu -> dropout
    h = jnp.dot(x.astype(mxu_dt), w1_ref[...],
                preferred_element_type=jnp.float32) + b1_ref[...]
    h = jnp.maximum(h, 0.0)
    if seed_u32 is not None:
        h = _dropout(h, seed_u32, 0x68BC21EB, drop_prob)

    # fc2 -> relu -> dropout
    h = jnp.dot(h.astype(mxu_dt), w2_ref[...],
                preferred_element_type=jnp.float32) + b2_ref[...]
    h = jnp.maximum(h, 0.0)
    if seed_u32 is not None:
        h = _dropout(h, seed_u32, 0x02E5BE93, drop_prob)

    # fc3 -> log_softmax over the feature (lane) axis.  Padded logit columns
    # carry a -1e30 bias (set in the wrapper) so max / lse are untouched.
    logits = jnp.dot(h.astype(mxu_dt), w3_ref[...],
                     preferred_element_type=jnp.float32) + b3_ref[...]
    m = jnp.max(logits, axis=1, keepdims=True)        # XLU
    shifted = logits - m
    lse = jnp.log(jnp.sum(jnp.exp(shifted), axis=1, keepdims=True))  # EUP+XLU
    o_ref[...] = (shifted - lse).astype(o_ref.dtype)  # lane-dense unmasked vst


def _kernel_train(seed_ref, x_ref, w1, b1, w2, b2, w3, b3, o_ref,
                  *, drop_prob, use_bf16):
    _ff_body(x_ref, w1, b1, w2, b2, w3, b3, o_ref,
             drop_prob=drop_prob, training=True, seed_ref=seed_ref,
             use_bf16=use_bf16)


def _kernel_eval(x_ref, w1, b1, w2, b2, w3, b3, o_ref, *, use_bf16):
    _ff_body(x_ref, w1, b1, w2, b2, w3, b3, o_ref,
             drop_prob=0.0, training=False, seed_ref=None, use_bf16=use_bf16)


def ff_classifier_forward(x, params, *, drop_prob=0.5, training=False, seed=0,
                          block_batch=256, use_bf16=False):
    """x: (B, in_features) f32. params: (w1, b1, w2, b2, w3, b3) with
    w_i of shape (in, out) and b_i of shape (out,)."""
    w1, b1, w2, b2, w3, b3 = params
    B, F_in = x.shape
    H = w1.shape[1]
    O = w3.shape[1]

    # Lane-dense padding of every feature dim.
    Fp = _round_up(F_in, _LANE)
    Hp = _round_up(H, _LANE)
    Op = _round_up(O, _LANE)

    # Batch tile: amortize per-step overhead; weights stay resident across steps.
    TB = min(block_batch, _round_up(B, _SUBLANE))
    Bp = _round_up(B, TB)
    grid = (Bp // TB,)

    w_dt = jnp.bfloat16 if use_bf16 else jnp.float32

    xp = jnp.zeros((Bp, Fp), jnp.float32).at[:B, :F_in].set(x)
    w1p = jnp.zeros((Fp, Hp), w_dt).at[:F_in, :H].set(w1.astype(w_dt))
    w2p = jnp.zeros((Hp, Hp), w_dt).at[:H, :H].set(w2.astype(w_dt))
    w3p = jnp.zeros((Hp, Op), w_dt).at[:H, :O].set(w3.astype(w_dt))
    b1p = jnp.zeros((1, Hp), jnp.float32).at[0, :H].set(b1)
    b2p = jnp.zeros((1, Hp), jnp.float32).at[0, :H].set(b2)
    # Padded logit columns get a huge negative bias -> ignored by log_softmax.
    b3p = jnp.full((1, Op), _NEG_BIG, jnp.float32).at[0, :O].set(b3)

    def blk(shape, imap):
        # Swallow the (optional) scalar-prefetch ref arg in the index_map.
        return pl.BlockSpec(shape, lambda i, *_: imap(i))

    in_specs = [
        blk((TB, Fp), lambda i: (i, 0)),      # x: blocked over batch
        blk((Fp, Hp), lambda i: (0, 0)),      # weights / biases: resident
        blk((1, Hp), lambda i: (0, 0)),
        blk((Hp, Hp), lambda i: (0, 0)),
        blk((1, Hp), lambda i: (0, 0)),
        blk((Hp, Op), lambda i: (0, 0)),
        blk((1, Op), lambda i: (0, 0)),
    ]
    out_spec = blk((TB, Op), lambda i: (i, 0))

    compiler_params = pltpu.CompilerParams(
        dimension_semantics=("parallel",),     # independent batch tiles
        vmem_limit_bytes=32 * 1024 * 1024,     # explicit, safe on v5e/v6e/v7x
    )
    out_shape = jax.ShapeDtypeStruct((Bp, Op), jnp.float32)

    if training and drop_prob > 0.0:
        kernel = functools.partial(_kernel_train, drop_prob=float(drop_prob),
                                   use_bf16=use_bf16)
        grid_spec = pltpu.PrefetchScalarGridSpec(
            num_scalar_prefetch=1, grid=grid,
            in_specs=in_specs, out_specs=out_spec)
        seed_arr = jnp.asarray([seed], dtype=jnp.int32)
        out = pl.pallas_call(kernel, out_shape=out_shape, grid_spec=grid_spec,
                             compiler_params=compiler_params)(
            seed_arr, xp, w1p, b1p, w2p, b2p, w3p, b3p)
    else:
        # Inference path: no scalar-prefetch seed argument at all.
        kernel = functools.partial(_kernel_eval, use_bf16=use_bf16)
        grid_spec = pltpu.PrefetchScalarGridSpec(
            num_scalar_prefetch=0, grid=grid,
            in_specs=in_specs, out_specs=out_spec)
        out = pl.pallas_call(kernel, out_shape=out_shape, grid_spec=grid_spec,
                             compiler_params=compiler_params)(
            xp, w1p, b1p, w2p, b2p, w3p, b3p)

    return out[:B, :O]


def _init_params(key, in_features, hidden_features, out_features):
    """Deterministic torch.nn.Linear-style init, weights stored as (in, out)."""
    ks = jax.random.split(key, 6)

    def linear(kw, kb, fan_in, fan_out):
        bound = 1.0 / np.sqrt(fan_in)
        w = jax.random.uniform(kw, (fan_in, fan_out), jnp.float32, -bound, bound)
        b = jax.random.uniform(kb, (fan_out,), jnp.float32, -bound, bound)
        return w, b

    w1, b1 = linear(ks[0], ks[1], in_features, hidden_features)
    w2, b2 = linear(ks[2], ks[3], hidden_features, hidden_features)
    w3, b3 = linear(ks[4], ks[5], hidden_features, out_features)
    return (w1, b1, w2, b2, w3, b3)


def _reference_eval(x, params):
    """Pure-JAX reference (eval mode: dropout = identity)."""
    w1, b1, w2, b2, w3, b3 = params
    hi = jax.lax.Precision.HIGHEST
    h = jnp.maximum(jnp.dot(x, w1, precision=hi) + b1, 0.0)
    h = jnp.maximum(jnp.dot(h, w2, precision=hi) + b2, 0.0)
    logits = jnp.dot(h, w3, precision=hi) + b3
    return jax.nn.log_softmax(logits, axis=1)


if __name__ == "__main__":
    B, IN, HID, OUT = 8, 32, 64, 16
    key = jax.random.PRNGKey(0)
    kx, kp, kx2 = jax.random.split(key, 3)

    x = jax.random.normal(kx, (B, IN), dtype=jnp.float32)
    params = _init_params(kp, IN, HID, OUT)

    # Eval mode (dropout identity): check against pure-JAX reference.
    out_eval = jax.block_until_ready(ff_classifier_forward(x, params, training=False))
    ref = _reference_eval(x, params)
    np.testing.assert_allclose(np.asarray(out_eval), np.asarray(ref),
                               rtol=1e-4, atol=1e-5)

    # Larger, non-multiple batch: exercises the batched grid (>1 step),
    # resident weights, and batch/feature padding.
    x_big = jax.random.normal(kx2, (300, IN), dtype=jnp.float32)
    out_big = jax.block_until_ready(
        ff_classifier_forward(x_big, params, training=False, block_batch=256))
    ref_big = _reference_eval(x_big, params)
    np.testing.assert_allclose(np.asarray(out_big), np.asarray(ref_big),
                               rtol=1e-4, atol=1e-5)

    # Training mode: dropout active (hash-based mask, distinct seed per tile).
    out_train = jax.block_until_ready(
        ff_classifier_forward(x_big, params, training=True, seed=1234,
                              block_batch=256))
    assert out_train.shape == (300, OUT)
    assert bool(jnp.all(jnp.isfinite(out_train)))
    # log_softmax rows must exponentiate-sum to 1 even with dropout upstream.
    assert bool(jnp.allclose(jnp.sum(jnp.exp(out_train), axis=1), 1.0, atol=1e-4))

    print("KERNEL_OK")
</pallas_src>

<mosaic_0001>
module attributes {stable_mosaic.version = 11 : i64} {
  func.func @_kernel_eval(%arg0: i32, %arg1: memref<8x128xf32, #tpu.memory_space<vmem>>, %arg2: memref<128x128xf32, #tpu.memory_space<vmem>>, %arg3: memref<1x128xf32, #tpu.memory_space<vmem>>, %arg4: memref<128x128xf32, #tpu.memory_space<vmem>>, %arg5: memref<1x128xf32, #tpu.memory_space<vmem>>, %arg6: memref<128x128xf32, #tpu.memory_space<vmem>>, %arg7: memref<1x128xf32, #tpu.memory_space<vmem>>, %arg8: memref<8x128xf32, #tpu.memory_space<vmem>>) attributes {dimension_semantics = [#tpu.dimension_semantics<parallel>], iteration_bounds = array<i64: 1>, scalar_prefetch = 0 : i64, scratch_operands = 0 : i64, tpu.core_type = #tpu.core_type<tc>, window_params = [{transform_indices = @transform_0, window_bounds = array<i64: 8, 128>}, {pipeline_mode = #tpu.pipeline_mode<synchronous>, transform_indices = @transform_1, window_bounds = array<i64: 128, 128>}, {pipeline_mode = #tpu.pipeline_mode<synchronous>, transform_indices = @transform_2, window_bounds = array<i64: 1, 128>}, {pipeline_mode = #tpu.pipeline_mode<synchronous>, transform_indices = @transform_3, window_bounds = array<i64: 128, 128>}, {pipeline_mode = #tpu.pipeline_mode<synchronous>, transform_indices = @transform_4, window_bounds = array<i64: 1, 128>}, {pipeline_mode = #tpu.pipeline_mode<synchronous>, transform_indices = @transform_5, window_bounds = array<i64: 128, 128>}, {pipeline_mode = #tpu.pipeline_mode<synchronous>, transform_indices = @transform_6, window_bounds = array<i64: 1, 128>}, {transform_indices = @transform_7, window_bounds = array<i64: 8, 128>}]} {
    %c0 = arith.constant 0 : index
    %c0_0 = arith.constant 0 : index
    %0 = vector.load %arg1[%c0, %c0_0] : memref<8x128xf32, #tpu.memory_space<vmem>>, vector<8x128xf32>
    %c0_1 = arith.constant 0 : index
    %c0_2 = arith.constant 0 : index
    %1 = vector.load %arg2[%c0_1, %c0_2] : memref<128x128xf32, #tpu.memory_space<vmem>>, vector<128x128xf32>
    %cst = arith.constant dense<0.000000e+00> : vector<8x128xf32>
    %2 = tpu.matmul %0, %1, %cst {dimension_numbers = #tpu.dot_dimension_numbers<[1], [0], [0], [1], [0, 0, 1, 1], [], []>} : vector<8x128xf32>, vector<128x128xf32>, vector<8x128xf32> -> vector<8x128xf32>
    %c0_3 = arith.constant 0 : index
    %c0_4 = arith.constant 0 : index
    %3 = vector.load %arg3[%c0_3, %c0_4] : memref<1x128xf32, #tpu.memory_space<vmem>>, vector<1x128xf32>
    %4 = vector.broadcast %3 : vector<1x128xf32> to vector<8x128xf32>
    %5 = arith.addf %2, %4 : vector<8x128xf32>
    %cst_5 = arith.constant 0.000000e+00 : f32
    %6 = vector.broadcast %cst_5 : f32 to vector<8x128xf32>
    %7 = arith.maximumf %5, %6 : vector<8x128xf32>
    %c0_6 = arith.constant 0 : index
    %c0_7 = arith.constant 0 : index
    %8 = vector.load %arg4[%c0_6, %c0_7] : memref<128x128xf32, #tpu.memory_space<vmem>>, vector<128x128xf32>
    %cst_8 = arith.constant dense<0.000000e+00> : vector<8x128xf32>
    %9 = tpu.matmul %7, %8, %cst_8 {dimension_numbers = #tpu.dot_dimension_numbers<[1], [0], [0], [1], [0, 0, 1, 1], [], []>} : vector<8x128xf32>, vector<128x128xf32>, vector<8x128xf32> -> vector<8x128xf32>
    %c0_9 = arith.constant 0 : index
    %c0_10 = arith.constant 0 : index
    %10 = vector.load %arg5[%c0_9, %c0_10] : memref<1x128xf32, #tpu.memory_space<vmem>>, vector<1x128xf32>
    %11 = vector.broadcast %10 : vector<1x128xf32> to vector<8x128xf32>
    %12 = arith.addf %9, %11 : vector<8x128xf32>
    %cst_11 = arith.constant 0.000000e+00 : f32
    %13 = vector.broadcast %cst_11 : f32 to vector<8x128xf32>
    %14 = arith.maximumf %12, %13 : vector<8x128xf32>
    %c0_12 = arith.constant 0 : index
    %c0_13 = arith.constant 0 : index
    %15 = vector.load %arg6[%c0_12, %c0_13] : memref<128x128xf32, #tpu.memory_space<vmem>>, vector<128x128xf32>
    %cst_14 = arith.constant dense<0.000000e+00> : vector<8x128xf32>
    %16 = tpu.matmul %14, %15, %cst_14 {dimension_numbers = #tpu.dot_dimension_numbers<[1], [0], [0], [1], [0, 0, 1, 1], [], []>} : vector<8x128xf32>, vector<128x128xf32>, vector<8x128xf32> -> vector<8x128xf32>
    %c0_15 = arith.constant 0 : index
    %c0_16 = arith.constant 0 : index
    %17 = vector.load %arg7[%c0_15, %c0_16] : memref<1x128xf32, #tpu.memory_space<vmem>>, vector<1x128xf32>
    %18 = vector.broadcast %17 : vector<1x128xf32> to vector<8x128xf32>
    %19 = arith.addf %16, %18 : vector<8x128xf32>
    %cst_17 = arith.constant dense<0xFF800000> : vector<8xf32>
    %20 = vector.multi_reduction <maximumf>, %19, %cst_17 [1] : vector<8x128xf32> to vector<8xf32>
    %21 = vector.shape_cast %20 : vector<8xf32> to vector<8x1xf32>
    %22 = vector.broadcast %21 : vector<8x1xf32> to vector<8x128xf32>
    %23 = arith.subf %19, %22 : vector<8x128xf32>
    %24 = math.exp %23 : vector<8x128xf32>
    %cst_18 = arith.constant dense<0.000000e+00> : vector<8xf32>
    %25 = vector.multi_reduction <add>, %24, %cst_18 [1] : vector<8x128xf32> to vector<8xf32>
    %26 = vector.shape_cast %25 : vector<8xf32> to vector<8x1xf32>
    %27 = math.log %26 : vector<8x1xf32>
    %28 = vector.broadcast %27 : vector<8x1xf32> to vector<8x128xf32>
    %29 = arith.subf %23, %28 : vector<8x128xf32>
    %c0_19 = arith.constant 0 : index
    %c0_20 = arith.constant 0 : index
    %30 = vector.load %arg8[%c0_19, %c0_20] : memref<8x128xf32, #tpu.memory_space<vmem>>, vector<8x128xf32>
    tpu.vector_store %arg8[%c0_19, %c0_20], %29 {strides = array<i32>} : memref<8x128xf32, #tpu.memory_space<vmem>>, vector<8x128xf32>,
    return
  }
  func.func @transform_0(%arg0: i32) -> (i32, i32) {
    %c0_i32 = arith.constant 0 : i32
    %c0_i32_0 = arith.constant 0 : i32
    return %arg0, %c0_i32 : i32, i32
  }
  func.func @transform_1(%arg0: i32) -> (i32, i32) {
    %c0_i32 = arith.constant 0 : i32
    %c0_i32_0 = arith.constant 0 : i32
    %c0_i32_1 = arith.constant 0 : i32
    return %c0_i32, %c0_i32_0 : i32, i32
  }
  func.func @transform_2(%arg0: i32) -> (i32, i32) {
    %c0_i32 = arith.constant 0 : i32
    %c0_i32_0 = arith.constant 0 : i32
    %c0_i32_1 = arith.constant 0 : i32
    return %c0_i32, %c0_i32_0 : i32, i32
  }
  func.func @transform_3(%arg0: i32) -> (i32, i32) {
    %c0_i32 = arith.constant 0 : i32
    %c0_i32_0 = arith.constant 0 : i32
    %c0_i32_1 = arith.constant 0 : i32
    return %c0_i32, %c0_i32_0 : i32, i32
  }
  func.func @transform_4(%arg0: i32) -> (i32, i32) {
    %c0_i32 = arith.constant 0 : i32
    %c0_i32_0 = arith.constant 0 : i32
    %c0_i32_1 = arith.constant 0 : i32
    return %c0_i32, %c0_i32_0 : i32, i32
  }
  func.func @transform_5(%arg0: i32) -> (i32, i32) {
    %c0_i32 = arith.constant 0 : i32
    %c0_i32_0 = arith.constant 0 : i32
    %c0_i32_1 = arith.constant 0 : i32
    return %c0_i32, %c0_i32_0 : i32, i32
  }
  func.func @transform_6(%arg0: i32) -> (i32, i32) {
    %c0_i32 = arith.constant 0 : i32
    %c0_i32_0 = arith.constant 0 : i32
    %c0_i32_1 = arith.constant 0 : i32
    return %c0_i32, %c0_i32_0 : i32, i32
  }
  func.func @transform_7(%arg0: i32) -> (i32, i32) {
    %c0_i32 = arith.constant 0 : i32
    %c0_i32_0 = arith.constant 0 : i32
    return %arg0, %c0_i32 : i32, i32
  }
}

</mosaic_0001>

<llo_original>
// kernel: tpu_custom_call.1
$region0: #{tpu_custom_call.1}
  #allocation0 [shape = 'u32[]', space=smem, size = 0x4, offset = 0x4, fixed_abs, tag = 'smem constant byte address 0x4 - core index']
  #allocation1 [shape = 'u32[144,128]{1,0:T(1,128)}', space=vmem, size = 0x12000, scoped, tag = 'internal scratch']
  %s0 = inlined_call_operand.hbm [shape: f32[8,128], index: 0, kind: input, shape index: {}]
  %s1 = inlined_call_operand.hbm [shape: f32[128,128], index: 1, kind: input, shape index: {}]
  %s2 = inlined_call_operand.vmem [shape: f32[1,128], index: 2, kind: input, shape index: {}]
  %s3 = inlined_call_operand.hbm [shape: f32[128,128], index: 3, kind: input, shape index: {}]
  %s4 = inlined_call_operand.vmem [shape: f32[1,128], index: 4, kind: input, shape index: {}]
  %s5 = inlined_call_operand.hbm [shape: f32[128,128], index: 5, kind: input, shape index: {}]
  %s6 = inlined_call_operand.vmem [shape: f32[1,128], index: 6, kind: input, shape index: {}]
  %s7 = inlined_call_operand.hbm [shape: f32[8,128], index: 7, kind: output, shape index: {}]
  %s8 = sld [smem:[#allocation0]]
  $region54: #{tpu_custom_call.1} parent=0
    _
  %s10 = ssub.s32 1, %s8
  %s11 = scalar_select 0, %s10, %s8
  $region1: #{tpu_custom_call.1} parent=0
    #allocation2 [shape = 'u8[4096]{0}', space=vmem, size = 0x1000, scoped, tag = 'input window, operand 0, single buffered']
    #allocation3 [shape = 's32[1]{0}', space=sflag, size = 0x4, scoped, tag = 'scoped memory for tpu_custom_call.1']
    #allocation4 [shape = 's32[1]{0}', space=sflag, size = 0x4, scoped, tag = 'scoped memory for tpu_custom_call.1']
    #allocation5 [shape = 'u8[65536]{0}', space=vmem, size = 0x10000, scoped, tag = 'input window, operand 1, single buffered']
    #allocation6 [shape = 's32[1]{0}', space=sflag, size = 0x4, scoped, tag = 'scoped memory for tpu_custom_call.1']
    #allocation7 [shape = 'u8[65536]{0}', space=vmem, size = 0x10000, scoped, tag = 'input window, operand 3, single buffered']
    #allocation8 [shape = 'u8[65536]{0}', space=vmem, size = 0x10000, scoped, tag = 'input window, operand 5, single buffered']
    #allocation9 [shape = 's32[1]{0}', space=sflag, size = 0x4, scoped, tag = 'scoped memory for tpu_custom_call.1']
    #allocation10 [shape = 'u8[4096]{0}', space=vmem, size = 0x1000, scoped, tag = 'output window, operand 0, single buffered']
    %12 = vsyncpa [#allocation3], 0
    %13 = vsyncpa [#allocation6], 0
    %14 = vsyncpa [#allocation9], 0
    %15 = vsyncpa [#allocation4], 0
    // Predicated region
    $region2: #{tpu_custom_call.1} parent=1 // pred_check
      _
    $region3: #{tpu_custom_call.1} parent=1 // pred_check_branch
      %17 = sbr.rel (0) target = $region5
    $region4: #{tpu_custom_call.1} parent=1 // pred_region
      %s19 = ssub.s32 128, 128
      %20 = vsyncadd [#allocation3], %s19
      %s22 = sshll.u32 [#allocation2], 4
      %s23 = int_to_ptr.vmem [resolvable:$true] %s22
      %25 = dma.hbm_to_vmem [thread:$0]  %s0, 128, %s23, [#allocation3]
    $region5: #{tpu_custom_call.1} parent=1 // pred_fallthru
      _
    // Predicated region
    $region6: #{tpu_custom_call.1} parent=1 // pred_check
      _
    $region7: #{tpu_custom_call.1} parent=1 // pred_check_branch
      %27 = sbr.rel (0) target = $region9
    $region8: #{tpu_custom_call.1} parent=1 // pred_region
      %s29 = ssub.s32 2048, 2048
      %30 = vsyncadd [#allocation6], %s29
      %s31 = sshll.u32 [#allocation5], 4
      %s32 = int_to_ptr.vmem [resolvable:$true] %s31
      %37 = dma.hbm_to_vmem [thread:$0]  %s1, 2048, %s32, [#allocation6], 128, 128, 8
    $region9: #{tpu_custom_call.1} parent=1 // pred_fallthru
      _
    // Predicated region
    $region10: #{tpu_custom_call.1} parent=1 // pred_check
      _
    $region11: #{tpu_custom_call.1} parent=1 // pred_check_branch
      %39 = sbr.rel (0) target = $region13
    $region12: #{tpu_custom_call.1} parent=1 // pred_region
      _
    $region13: #{tpu_custom_call.1} parent=1 // pred_fallthru
      _
    // Predicated region
    $region14: #{tpu_custom_call.1} parent=1 // pred_check
      _
    $region15: #{tpu_custom_call.1} parent=1 // pred_check_branch
      %41 = sbr.rel (0) target = $region17
    $region16: #{tpu_custom_call.1} parent=1 // pred_region
      %s43 = ssub.s32 2048, 2048
      %44 = vsyncadd [#allocation6], %s43
      %s45 = sshll.u32 [#allocation7], 4
      %s46 = int_to_ptr.vmem [resolvable:$true] %s45
      %51 = dma.hbm_to_vmem [thread:$0]  %s3, 2048, %s46, [#allocation6], 128, 128, 8
    $region17: #{tpu_custom_call.1} parent=1 // pred_fallthru
      _
    // Predicated region
    $region18: #{tpu_custom_call.1} parent=1 // pred_check
      _
    $region19: #{tpu_custom_call.1} parent=1 // pred_check_branch
      %53 = sbr.rel (0) target = $region21
    $region20: #{tpu_custom_call.1} parent=1 // pred_region
      _
    $region21: #{tpu_custom_call.1} parent=1 // pred_fallthru
      _
    // Predicated region
    $region22: #{tpu_custom_call.1} parent=1 // pred_check
      _
    $region23: #{tpu_custom_call.1} parent=1 // pred_check_branch
      %55 = sbr.rel (0) target = $region25
    $region24: #{tpu_custom_call.1} parent=1 // pred_region
      %s57 = ssub.s32 2048, 2048
      %58 = vsyncadd [#allocation9], %s57
      %s59 = sshll.u32 [#allocation8], 4
      %s60 = int_to_ptr.vmem [resolvable:$true] %s59
      %65 = dma.hbm_to_vmem [thread:$0]  %s5, 2048, %s60, [#allocation9], 128, 128, 8
    $region25: #{tpu_custom_call.1} parent=1 // pred_fallthru
      _
    // Predicated region
    $region26: #{tpu_custom_call.1} parent=1 // pred_check
      _
    $region27: #{tpu_custom_call.1} parent=1 // pred_check_branch
      %67 = sbr.rel (0) target = $region29
    $region28: #{tpu_custom_call.1} parent=1 // pred_region
      _
    $region29: #{tpu_custom_call.1} parent=1 // pred_fallthru
      _
    // Predicated region
    $region30: #{tpu_custom_call.1} parent=1 // pred_check
      _
    $region31: #{tpu_custom_call.1} parent=1 // pred_check_branch
      %69 = sbr.rel (0) target = $region33
    $region32: #{tpu_custom_call.1} parent=1 // pred_region
      %70 = dma.done [#allocation3], 128
    $region33: #{tpu_custom_call.1} parent=1 // pred_fallthru
      _
    // Predicated region
    $region34: #{tpu_custom_call.1} parent=1 // pred_check
      _
    $region35: #{tpu_custom_call.1} parent=1 // pred_check_branch
      %72 = sbr.rel (0) target = $region37
    $region36: #{tpu_custom_call.1} parent=1 // pred_region
      %73 = dma.done [#allocation6], 2048
    $region37: #{tpu_custom_call.1} parent=1 // pred_fallthru
      _
    // Predicated region
    $region38: #{tpu_custom_call.1} parent=1 // pred_check
      _
    $region39: #{tpu_custom_call.1} parent=1 // pred_check_branch
      %75 = sbr.rel (0) target = $region41
    $region40: #{tpu_custom_call.1} parent=1 // pred_region
      %76 = dma.done [#allocation6], 2048
    $region41: #{tpu_custom_call.1} parent=1 // pred_fallthru
      _
    // Predicated region
    $region42: #{tpu_custom_call.1} parent=1 // pred_check
      _
    $region43: #{tpu_custom_call.1} parent=1 // pred_check_branch
      %78 = sbr.rel (0) target = $region45
    $region44: #{tpu_custom_call.1} parent=1 // pred_region
      %79 = dma.done [#allocation9], 2048
    $region45: #{tpu_custom_call.1} parent=1 // pred_fallthru
      _
    %v80 = vld [vmem:[#allocation2] sm:$0xff]
    %v81 = vld [vmem:[#allocation5] sm:$0xff]
    %v82 = vld [vmem:[#allocation5 + $0x8] sm:$0xff]
    %v83 = vld [vmem:[#allocation5 + $0x10] sm:$0xff]
    %v84 = vld [vmem:[#allocation5 + $0x18] sm:$0xff]
    %v85 = vld [vmem:[#allocation5 + $0x20] sm:$0xff]
    %v86 = vld [vmem:[#allocation5 + $0x28] sm:$0xff]
    %v87 = vld [vmem:[#allocation5 + $0x30] sm:$0xff]
    %v88 = vld [vmem:[#allocation5 + $0x38] sm:$0xff]
    %v89 = vld [vmem:[#allocation5 + $0x40] sm:$0xff]
    %v90 = vld [vmem:[#allocation5 + $0x48] sm:$0xff]
    %v91 = vld [vmem:[#allocation5 + $0x50] sm:$0xff]
    %v92 = vld [vmem:[#allocation5 + $0x58] sm:$0xff]
    %v93 = vld [vmem:[#allocation5 + $0x60] sm:$0xff]
    %v94 = vld [vmem:[#allocation5 + $0x68] sm:$0xff]
    %v95 = vld [vmem:[#allocation5 + $0x70] sm:$0xff]
    %v96 = vld [vmem:[#allocation5 + $0x78] sm:$0xff]
    %v97 = vld [vmem:[%s2] sm:$0x1]
    %v99 = vlaneseq
    %v100 = vshrl.u32 %v99, 7
    %v101 = vsub.s32 0, %v100
    %v102 = vrot.slane %v97, %v101
    %104 = vmatprep.subr.mxu0 0.0
    %105 = vmatpush1.msra.mxu0 %v81
    %106 = vmatprep.subr.mxu0 0.0
    %107 = vmatpush1.msra.mxu0 %v82
    %108 = vmatprep.subr.mxu0 0.0
    %109 = vmatpush1.msra.mxu0 %v83
    %110 = vmatprep.subr.mxu0 0.0
    %111 = vmatpush1.msra.mxu0 %v84
    %112 = vmatprep.subr.mxu0 0.0
    %113 = vmatpush1.msra.mxu0 %v85
    %114 = vmatprep.subr.mxu0 0.0
    %115 = vmatpush1.msra.mxu0 %v86
    %116 = vmatprep.subr.mxu0 0.0
    %117 = vmatpush1.msra.mxu0 %v87
    %118 = vmatprep.subr.mxu0 0.0
    %119 = vmatpush1.msra.mxu0 %v88
    %120 = vmatprep.subr.mxu0 0.0
    %121 = vmatpush1.msra.mxu0 %v89
    %122 = vmatprep.subr.mxu0 0.0
    %123 = vmatpush1.msra.mxu0 %v90
    %124 = vmatprep.subr.mxu0 0.0
    %125 = vmatpush1.msra.mxu0 %v91
    %126 = vmatprep.subr.mxu0 0.0
    %127 = vmatpush1.msra.mxu0 %v92
    %128 = vmatprep.subr.mxu0 0.0
    %129 = vmatpush1.msra.mxu0 %v93
    %130 = vmatprep.subr.mxu0 0.0
    %131 = vmatpush1.msra.mxu0 %v94
    %132 = vmatprep.subr.mxu0 0.0
    %133 = vmatpush1.msra.mxu0 %v95
    %134 = vmatprep.subr.mxu0 0.0
    %135 = vmatpush1.msra.mxu0 %v96
    %136 = vmatprep.subr.mxu0 0.0
    %137 = vmatpush1.msra.mxu0 0.0
    %138 = vmatprep.subr.mxu0 0.0
    %139 = vmatpush1.msra.mxu0 0.0
    %140 = vmatprep.subr.mxu0 0.0
    %141 = vmatpush1.msra.mxu0 0.0
    %142 = vmatprep.subr.mxu0 0.0
    %143 = vmatpush1.msra.mxu0 0.0
    %144 = vmatprep.subr.mxu0 0.0
    %145 = vmatpush1.msra.mxu0 0.0
    %146 = vmatprep.subr.mxu0 0.0
    %147 = vmatpush1.msra.mxu0 0.0
    %148 = vmatprep.subr.mxu0 0.0
    %149 = vmatpush1.msra.mxu0 0.0
    %150 = vmatprep.subr.mxu0 0.0
    %151 = vmatpush1.msra.mxu0 0.0
    %152 = vmatprep.subr.mxu0 0.0
    %153 = vmatpush1.msra.mxu0 0.0
    %154 = vmatprep.subr.mxu0 0.0
    %155 = vmatpush1.msra.mxu0 0.0
    %156 = vmatprep.subr.mxu0 0.0
    %157 = vmatpush1.msra.mxu0 0.0
    %158 = vmatprep.subr.mxu0 0.0
    %159 = vmatpush1.msra.mxu0 0.0
    %160 = vmatprep.subr.mxu0 0.0
    %161 = vmatpush1.msra.mxu0 0.0
    %162 = vmatprep.subr.mxu0 0.0
    %163 = vmatpush1.msra.mxu0 0.0
    %164 = vmatprep.subr.mxu0 0.0
    %165 = vmatpush1.msra.mxu0 0.0
    %166 = vmatprep.subr.mxu0 0.0
    %167 = vmatpush1.msra.mxu0 0.0
    %168 = vmatprep.mubr.f32.mxu0 0.0
    %169 = vmatmul.mubr.f32.gmra.mrb[0].mxu0 %v80
    %v170 = vpop.f32.mrb[0].mxu0
    %v171 = vadd.f32 %v102, %v170
    %v172 = vpop.f32.mrb[0].mxu0
    %173 = vdwg.mxu0
    %v174 = vmax.f32 %v171, 0.0
    %v175 = vld [vmem:[#allocation7] sm:$0xff]
    %v176 = vld [vmem:[#allocation7 + $0x8] sm:$0xff]
    %v177 = vld [vmem:[#allocation7 + $0x10] sm:$0xff]
    %v178 = vld [vmem:[#allocation7 + $0x18] sm:$0xff]
    %v179 = vld [vmem:[#allocation7 + $0x20] sm:$0xff]
    %v180 = vld [vmem:[#allocation7 + $0x28] sm:$0xff]
    %v181 = vld [vmem:[#allocation7 + $0x30] sm:$0xff]
    %v182 = vld [vmem:[#allocation7 + $0x38] sm:$0xff]
    %v183 = vld [vmem:[#allocation7 + $0x40] sm:$0xff]
    %v184 = vld [vmem:[#allocation7 + $0x48] sm:$0xff]
    %v185 = vld [vmem:[#allocation7 + $0x50] sm:$0xff]
    %v186 = vld [vmem:[#allocation7 + $0x58] sm:$0xff]
    %v187 = vld [vmem:[#allocation7 + $0x60] sm:$0xff]
    %v188 = vld [vmem:[#allocation7 + $0x68] sm:$0xff]
    %v189 = vld [vmem:[#allocation7 + $0x70] sm:$0xff]
    %v190 = vld [vmem:[#allocation7 + $0x78] sm:$0xff]
    %v191 = vld [vmem:[%s4] sm:$0x1]
    %v193 = vlaneseq
    %v194 = vshrl.u32 %v193, 7
    %v195 = vsub.s32 0, %v194
    %v196 = vrot.slane %v191, %v195
    %198 = vmatprep.subr.mxu0 0.0
    %199 = vmatpush1.msra.mxu0 %v175
    %200 = vmatprep.subr.mxu0 0.0
    %201 = vmatpush1.msra.mxu0 %v176
    %202 = vmatprep.subr.mxu0 0.0
    %203 = vmatpush1.msra.mxu0 %v177
    %204 = vmatprep.subr.mxu0 0.0
    %205 = vmatpush1.msra.mxu0 %v178
    %206 = vmatprep.subr.mxu0 0.0
    %207 = vmatpush1.msra.mxu0 %v179
    %208 = vmatprep.subr.mxu0 0.0
    %209 = vmatpush1.msra.mxu0 %v180
    %210 = vmatprep.subr.mxu0 0.0
    %211 = vmatpush1.msra.mxu0 %v181
    %212 = vmatprep.subr.mxu0 0.0
    %213 = vmatpush1.msra.mxu0 %v182
    %214 = vmatprep.subr.mxu0 0.0
    %215 = vmatpush1.msra.mxu0 %v183
    %216 = vmatprep.subr.mxu0 0.0
    %217 = vmatpush1.msra.mxu0 %v184
    %218 = vmatprep.subr.mxu0 0.0
    %219 = vmatpush1.msra.mxu0 %v185
    %220 = vmatprep.subr.mxu0 0.0
    %221 = vmatpush1.msra.mxu0 %v186
    %222 = vmatprep.subr.mxu0 0.0
    %223 = vmatpush1.msra.mxu0 %v187
    %224 = vmatprep.subr.mxu0 0.0
    %225 = vmatpush1.msra.mxu0 %v188
    %226 = vmatprep.subr.mxu0 0.0
    %227 = vmatpush1.msra.mxu0 %v189
    %228 = vmatprep.subr.mxu0 0.0
    %229 = vmatpush1.msra.mxu0 %v190
    %230 = vmatprep.subr.mxu0 0.0
    %231 = vmatpush1.msra.mxu0 0.0
    %232 = vmatprep.subr.mxu0 0.0
    %233 = vmatpush1.msra.mxu0 0.0
    %234 = vmatprep.subr.mxu0 0.0
    %235 = vmatpush1.msra.mxu0 0.0
    %236 = vmatprep.subr.mxu0 0.0
    %237 = vmatpush1.msra.mxu0 0.0
    %238 = vmatprep.subr.mxu0 0.0
    %239 = vmatpush1.msra.mxu0 0.0
    %240 = vmatprep.subr.mxu0 0.0
    %241 = vmatpush1.msra.mxu0 0.0
    %242 = vmatprep.subr.mxu0 0.0
    %243 = vmatpush1.msra.mxu0 0.0
    %244 = vmatprep.subr.mxu0 0.0
    %245 = vmatpush1.msra.mxu0 0.0
    %246 = vmatprep.subr.mxu0 0.0
    %247 = vmatpush1.msra.mxu0 0.0
    %248 = vmatprep.subr.mxu0 0.0
    %249 = vmatpush1.msra.mxu0 0.0
    %250 = vmatprep.subr.mxu0 0.0
    %251 = vmatpush1.msra.mxu0 0.0
    %252 = vmatprep.subr.mxu0 0.0
    %253 = vmatpush1.msra.mxu0 0.0
    %254 = vmatprep.subr.mxu0 0.0
    %255 = vmatpush1.msra.mxu0 0.0
    %256 = vmatprep.subr.mxu0 0.0
    %257 = vmatpush1.msra.mxu0 0.0
    %258 = vmatprep.subr.mxu0 0.0
    %259 = vmatpush1.msra.mxu0 0.0
    %260 = vmatprep.subr.mxu0 0.0
    %261 = vmatpush1.msra.mxu0 0.0
    %262 = vmatprep.mubr.f32.mxu0 0.0
    %263 = vmatmul.mubr.f32.gmra.mrb[0].mxu0 %v174
    %v264 = vpop.f32.mrb[0].mxu0
    %v265 = vadd.f32 %v196, %v264
    %v266 = vpop.f32.mrb[0].mxu0
    %267 = vdwg.mxu0
    %v268 = vmax.f32 %v265, 0.0
    %v269 = vld [vmem:[#allocation8] sm:$0xff]
    %v270 = vld [vmem:[#allocation8 + $0x8] sm:$0xff]
    %v271 = vld [vmem:[#allocation8 + $0x10] sm:$0xff]
    %v272 = vld [vmem:[#allocation8 + $0x18] sm:$0xff]
    %v273 = vld [vmem:[#allocation8 + $0x20] sm:$0xff]
    %v274 = vld [vmem:[#allocation8 + $0x28] sm:$0xff]
    %v275 = vld [vmem:[#allocation8 + $0x30] sm:$0xff]
    %v276 = vld [vmem:[#allocation8 + $0x38] sm:$0xff]
    %v277 = vld [vmem:[#allocation8 + $0x40] sm:$0xff]
    %v278 = vld [vmem:[#allocation8 + $0x48] sm:$0xff]
    %v279 = vld [vmem:[#allocation8 + $0x50] sm:$0xff]
    %v280 = vld [vmem:[#allocation8 + $0x58] sm:$0xff]
    %v281 = vld [vmem:[#allocation8 + $0x60] sm:$0xff]
    %v282 = vld [vmem:[#allocation8 + $0x68] sm:$0xff]
    %v283 = vld [vmem:[#allocation8 + $0x70] sm:$0xff]
    %v284 = vld [vmem:[#allocation8 + $0x78] sm:$0xff]
    %v285 = vld [vmem:[%s6] sm:$0x1]
    %v287 = vlaneseq
    %v288 = vshrl.u32 %v287, 7
    %v289 = vsub.s32 0, %v288
    %v290 = vrot.slane %v285, %v289
    %292 = vmatprep.subr.mxu0 0.0
    %293 = vmatpush1.msra.mxu0 %v269
    %294 = vmatprep.subr.mxu0 0.0
    %295 = vmatpush1.msra.mxu0 %v270
    %296 = vmatprep.subr.mxu0 0.0
    %297 = vmatpush1.msra.mxu0 %v271
    %298 = vmatprep.subr.mxu0 0.0
    %299 = vmatpush1.msra.mxu0 %v272
    %300 = vmatprep.subr.mxu0 0.0
    %301 = vmatpush1.msra.mxu0 %v273
    %302 = vmatprep.subr.mxu0 0.0
    %303 = vmatpush1.msra.mxu0 %v274
    %304 = vmatprep.subr.mxu0 0.0
    %305 = vmatpush1.msra.mxu0 %v275
    %306 = vmatprep.subr.mxu0 0.0
    %307 = vmatpush1.msra.mxu0 %v276
    %308 = vmatprep.subr.mxu0 0.0
    %309 = vmatpush1.msra.mxu0 %v277
    %310 = vmatprep.subr.mxu0 0.0
    %311 = vmatpush1.msra.mxu0 %v278
    %312 = vmatprep.subr.mxu0 0.0
    %313 = vmatpush1.msra.mxu0 %v279
    %314 = vmatprep.subr.mxu0 0.0
    %315 = vmatpush1.msra.mxu0 %v280
    %316 = vmatprep.subr.mxu0 0.0
    %317 = vmatpush1.msra.mxu0 %v281
    %318 = vmatprep.subr.mxu0 0.0
    %319 = vmatpush1.msra.mxu0 %v282
    %320 = vmatprep.subr.mxu0 0.0
    %321 = vmatpush1.msra.mxu0 %v283
    %322 = vmatprep.subr.mxu0 0.0
    %323 = vmatpush1.msra.mxu0 %v284
    %324 = vmatprep.subr.mxu0 0.0
    %325 = vmatpush1.msra.mxu0 0.0
    %326 = vmatprep.subr.mxu0 0.0
    %327 = vmatpush1.msra.mxu0 0.0
    %328 = vmatprep.subr.mxu0 0.0
    %329 = vmatpush1.msra.mxu0 0.0
    %330 = vmatprep.subr.mxu0 0.0
    %331 = vmatpush1.msra.mxu0 0.0
    %332 = vmatprep.subr.mxu0 0.0
    %333 = vmatpush1.msra.mxu0 0.0
    %334 = vmatprep.subr.mxu0 0.0
    %335 = vmatpush1.msra.mxu0 0.0
    %336 = vmatprep.subr.mxu0 0.0
    %337 = vmatpush1.msra.mxu0 0.0
    %338 = vmatprep.subr.mxu0 0.0
    %339 = vmatpush1.msra.mxu0 0.0
    %340 = vmatprep.subr.mxu0 0.0
    %341 = vmatpush1.msra.mxu0 0.0
    %342 = vmatprep.subr.mxu0 0.0
    %343 = vmatpush1.msra.mxu0 0.0
    %344 = vmatprep.subr.mxu0 0.0
    %345 = vmatpush1.msra.mxu0 0.0
    %346 = vmatprep.subr.mxu0 0.0
    %347 = vmatpush1.msra.mxu0 0.0
    %348 = vmatprep.subr.mxu0 0.0
    %349 = vmatpush1.msra.mxu0 0.0
    %350 = vmatprep.subr.mxu0 0.0
    %351 = vmatpush1.msra.mxu0 0.0
    %352 = vmatprep.subr.mxu0 0.0
    %353 = vmatpush1.msra.mxu0 0.0
    %354 = vmatprep.subr.mxu0 0.0
    %355 = vmatpush1.msra.mxu0 0.0
    %356 = vmatprep.mubr.f32.mxu0 0.0
    %357 = vmatmul.mubr.f32.gmra.mrb[0].mxu0 %v268
    %v358 = vpop.f32.mrb[0].mxu0
    %v359 = vadd.f32 %v290, %v358
    %v360 = vpop.f32.mrb[0].mxu0
    %361 = vdwg.mxu0
    %362 = vmax.xlane.f32.xlu0 %v359
    %v363 = vpop.xlane.xlu0 %362
    %v364 = vsub.f32 %v359, %v363
    %v365 = vmul.f32 %v364, 1.442695
    %v366 = vpow.pop %v365
    %367 = vadd.xlane.f32.xlu0 %v366
    %v368 = vpop.xlane.xlu0 %367
    %v369 = vlog2.pop %v368
    %v370 = vmul.f32 %v369, 0.6931472
    %v371 = vsub.f32 %v364, %v370
    %372 = vst [vmem:[#allocation10] sm:$0xff] %v371
    // Predicated region
    $region46: #{tpu_custom_call.1} parent=1 // pred_check
      _
    $region47: #{tpu_custom_call.1} parent=1 // pred_check_branch
      %374 = sbr.rel (0) target = $region49
    $region48: #{tpu_custom_call.1} parent=1 // pred_region
      %s376 = ssub.s32 128, 128
      %377 = vsyncadd [#allocation4], %s376
      %s379 = sshll.u32 [#allocation10], 4
      %s380 = int_to_ptr.vmem [resolvable:$true] %s379
      %382 = dma.vmem_to_hbm [thread:$0]  %s380, 128, %s7, [#allocation4]
    $region49: #{tpu_custom_call.1} parent=1 // pred_fallthru
      _
    // Predicated region
    $region50: #{tpu_custom_call.1} parent=1 // pred_check
      _
    $region51: #{tpu_custom_call.1} parent=1 // pred_check_branch
      %384 = sbr.rel (0) target = $region53
    $region52: #{tpu_custom_call.1} parent=1 // pred_region
      %385 = dma.done [#allocation4], 128
    $region53: #{tpu_custom_call.1} parent=1 // pred_fallthru
      _
    %386 = vsyncpa [#allocation3], 1
    %387 = vsyncpa [#allocation6], 1
    %388 = vsyncpa [#allocation9], 1
    %389 = vsyncpa [#allocation4], 1

</llo_original>
